<compile_context>
chip_gen: v5e
topology: v5e:2x2
jax: 0.10.0
libtpu: 0.0.40
codegen_flags: <defaults>
</compile_context>

<pallas_src>
import jax
import jax.numpy as jnp
from jax.experimental import pallas as pl
from jax.experimental.pallas import tpu as pltpu


def _round_up(x, m):
    return ((x + m - 1) // m) * m


def _vmem_capacity_bytes():
    """Per-core VMEM capacity; conservative (v7x per-TC) default if query fails."""
    try:
        return int(pltpu.get_tpu_info().vmem_capacity_bytes)
    except Exception:
        return 64 << 20


def gcn_agg_kernel(a_ref, xw_ref, b_ref, o_ref):
    """out_row_tile = bias + sum_k A[i, k] @ XW[k]  (accumulated in the f32 output)."""
    k = pl.program_id(1)

    @pl.when(k == 0)
    def _():
        # Seed the resident f32 output tile with the bias: bias added exactly once,
        # no accumulator scratch, no finalize copy.
        o_ref[...] = jnp.broadcast_to(b_ref[...], o_ref.shape)

    # bf16 x bf16 -> f32 on the MXU, accumulated into the resident output tile.
    o_ref[...] += jnp.dot(
        a_ref[...], xw_ref[...], preferred_element_type=jnp.float32
    )


def gcn_aggregate_pallas(a_norm_bf16, xw_bf16, bias_f32, *, tm, tk):
    n_pad = a_norm_bf16.shape[0]
    c_pad = xw_bf16.shape[1]
    grid = (n_pad // tm, n_pad // tk)

    # XW is DMA'd exactly once when tk == n_pad (constant block index -> resident);
    # otherwise it is re-read once per row tile.
    xw_passes = 1 if tk == n_pad else (n_pad // tm)
    cost = pl.CostEstimate(
        flops=2 * n_pad * n_pad * c_pad,
        transcendentals=0,
        bytes_accessed=(
            n_pad * n_pad * 2                    # A read (bf16)
            + xw_passes * n_pad * c_pad * 2      # XW read(s) (bf16)
            + n_pad * c_pad * 4                  # output write (f32)
            + c_pad * 4                          # bias
        ),
    )

    # Double-buffered A tiles + XW slab + resident f32 output tile + bias, plus
    # headroom, capped at the physical per-core VMEM of this generation.
    tile_bytes = (
        2 * tm * tk * 2          # A tiles (bf16, x2 buffers)
        + 2 * tk * c_pad * 2     # XW slab (bf16)
        + 2 * tm * c_pad * 4     # output row tile (f32)
        + 2 * c_pad * 4          # bias
    )
    cap = _vmem_capacity_bytes()
    vmem_limit = int(min(cap, max(tile_bytes + (8 << 20), 16 << 20)))

    return pl.pallas_call(
        gcn_agg_kernel,
        out_shape=jax.ShapeDtypeStruct((n_pad, c_pad), jnp.float32),
        grid_spec=pltpu.PrefetchScalarGridSpec(
            num_scalar_prefetch=0,
            grid=grid,
            in_specs=[
                pl.BlockSpec((tm, tk), lambda i, k: (i, k)),      # A row/col tile
                pl.BlockSpec((tk, c_pad), lambda i, k: (k, 0)),   # XW k-slab (resident if tk==n_pad)
                pl.BlockSpec((1, c_pad), lambda i, k: (0, 0)),    # bias (resident)
            ],
            out_specs=pl.BlockSpec((tm, c_pad), lambda i, k: (i, 0)),
        ),
        compiler_params=pltpu.CompilerParams(
            dimension_semantics=("parallel", "arbitrary"),
            vmem_limit_bytes=vmem_limit,
        ),
        cost_estimate=cost,
    )(a_norm_bf16, xw_bf16, bias_f32)


def build_normalized_adjacency(edge_index, edge_attr, num_nodes, n_pad=None):
    """GCN-normalized dense adjacency with self-loops, scattered directly at (n_pad, n_pad).

    Padded rows/cols stay zero, so no separate pad-copy pass over the O(N^2) buffer.
    # TODO(synk): exploit graph sparsity (CSR gather / scalar-prefetched block masks)
    # instead of materializing the dense O(N^2) adjacency.
    """
    if n_pad is None:
        n_pad = num_nodes
    src = edge_index[0]
    dst = edge_index[1]
    if edge_attr is None:
        w = jnp.ones(src.shape[0], dtype=jnp.float32)
    else:
        w = edge_attr.astype(jnp.float32).reshape(-1)
    # add self-loops with weight 1.0
    loops = jnp.arange(num_nodes, dtype=src.dtype)
    src = jnp.concatenate([src, loops])
    dst = jnp.concatenate([dst, loops])
    w = jnp.concatenate([w, jnp.ones(num_nodes, dtype=jnp.float32)])
    # symmetric normalization
    deg = jnp.zeros((num_nodes,), jnp.float32).at[dst].add(w)
    deg_inv_sqrt = jnp.where(deg > 0, 1.0 / jnp.sqrt(deg), 0.0)
    norm = deg_inv_sqrt[src] * w * deg_inv_sqrt[dst]
    a = jnp.zeros((n_pad, n_pad), jnp.float32).at[dst, src].add(norm)
    return a


def _pick_tiles(n, c_pad, budget):
    """Pick (n_pad, tm, tk): lane-aligned tiles sized to the per-generation VMEM budget."""
    if n <= 128:
        return 128, 128, 128

    # Modest node padding (128/512-aligned); decoupled from TK so the reduction tile
    # never inflates the O(N^2) adjacency for mid-size graphs.
    pad_unit = 512 if n > 512 else 128
    n_pad = _round_up(n, pad_unit)

    def fits(tm, tk):
        a_bytes = 2 * tm * tk * 2        # A tiles, bf16, double buffered
        xw_bytes = 2 * tk * c_pad * 2    # XW slab, bf16
        out_bytes = 2 * tm * c_pad * 4   # resident f32 output row tile
        bias_bytes = 2 * c_pad * 4
        return a_bytes + xw_bytes + out_bytes + bias_bytes <= budget

    # Row tiles: as large as possible, but keep >= 2 row tiles for megacore balance.
    tm_cands = [
        t for t in (1024, 512, 256, 128)
        if n_pad % t == 0 and (n_pad // t >= 2 or t == 128)
    ]
    if not tm_cands:
        tm_cands = [128]

    # Preferred: full reduction in one step (tk == n_pad) -> one long contiguous A
    # slab per row tile, XW resident in VMEM, no output revisit.
    for tm in tm_cands:
        if fits(tm, n_pad):
            return n_pad, tm, n_pad

    # Fallback for very large graphs: k-tiled reduction with multi-MiB A tiles
    # (XW re-read overhead ~ c_pad/tm of the A stream).
    tk_cands = [t for t in (4096, 2048, 1024, 512, 256, 128) if n_pad % t == 0]
    for tm in tm_cands:
        for tk in tk_cands:
            if fits(tm, tk):
                return n_pad, tm, tk
    return n_pad, 128, 128


def gcn_layer_forward(x, edge_index, weight, bias, edge_attr=None):
    n, c_in = x.shape
    c_out = weight.shape[1]
    c_pad = _round_up(max(c_out, 128), 128)

    budget = int(_vmem_capacity_bytes() * 0.6)
    n_pad, tm, tk = _pick_tiles(n, c_pad, budget)

    # Dense normalized adjacency built straight at the padded shape; single bf16 cast.
    a_pad = build_normalized_adjacency(edge_index, edge_attr, n, n_pad).astype(jnp.bfloat16)

    # Hoisted feature transform, lane-padded to c_pad columns (lane-dense store path).
    w_pad = jnp.zeros((c_in, c_pad), jnp.float32).at[:, :c_out].set(weight)
    x_pad = jnp.zeros((n_pad, c_in), jnp.float32).at[:n, :].set(x)
    xw_pad = jnp.dot(x_pad, w_pad, preferred_element_type=jnp.float32).astype(jnp.bfloat16)

    b_pad = jnp.zeros((1, c_pad), jnp.float32).at[0, :c_out].set(bias)

    out_pad = gcn_aggregate_pallas(a_pad, xw_pad, b_pad, tm=tm, tk=tk)
    return out_pad[:n, :c_out]


if __name__ == "__main__":
    key = jax.random.PRNGKey(0)
    k_x, k_w, k_b, k_e, k_a = jax.random.split(key, 5)

    num_nodes = 16
    in_channels = 8
    out_channels = 32
    num_edges = 40

    # node features [N, C_in]
    x = jax.random.normal(k_x, (num_nodes, in_channels), dtype=jnp.float32)
    # random directed edges [2, E]
    edge_index = jax.random.randint(k_e, (2, num_edges), 0, num_nodes, dtype=jnp.int32)
    # optional positive edge weights [E]
    edge_attr = jax.random.uniform(k_a, (num_edges,), dtype=jnp.float32) + 0.1

    # deterministic parameter init (GCNConv: weight [C_in, C_out], bias [C_out])
    weight = jax.random.normal(k_w, (in_channels, out_channels), dtype=jnp.float32) * (
        1.0 / jnp.sqrt(in_channels)
    )
    bias = jax.random.normal(k_b, (out_channels,), dtype=jnp.float32) * 0.01

    out = gcn_layer_forward(x, edge_index, weight, bias, edge_attr)
    out = jax.block_until_ready(out)
    assert out.shape == (num_nodes, out_channels)

    # Reference 1: identical math with A / XW quantized to bf16 like the kernel.
    a_ref = build_normalized_adjacency(edge_index, edge_attr, num_nodes)
    xw_ref = x @ weight
    a_q = a_ref.astype(jnp.bfloat16).astype(jnp.float32)
    xw_q = xw_ref.astype(jnp.bfloat16).astype(jnp.float32)
    ref_bf16 = a_q @ xw_q + bias[None, :]
    assert jnp.allclose(out, ref_bf16, atol=2e-3, rtol=2e-3), "mismatch vs bf16 ref"

    # Reference 2: full-f32 math (only bf16 input quantization error remains).
    ref_f32 = a_ref @ xw_ref + bias[None, :]
    assert jnp.allclose(out, ref_f32, atol=5e-2, rtol=5e-2), "mismatch vs f32 ref"

    print("KERNEL_OK")
</pallas_src>

<mosaic_0001>
module attributes {stable_mosaic.version = 11 : i64} {
  func.func @gcn_agg_kernel(%arg0: i32, %arg1: i32, %arg2: memref<128x128xbf16, #tpu.memory_space<vmem>>, %arg3: memref<128x128xbf16, #tpu.memory_space<vmem>>, %arg4: memref<1x128xf32, #tpu.memory_space<vmem>>, %arg5: memref<128x128xf32, #tpu.memory_space<vmem>>) attributes {dimension_semantics = [#tpu.dimension_semantics<parallel>, #tpu.dimension_semantics<arbitrary>], iteration_bounds = array<i64: 1, 1>, scalar_prefetch = 0 : i64, scratch_operands = 0 : i64, tpu.core_type = #tpu.core_type<tc>, window_params = [{transform_indices = @transform_0, window_bounds = array<i64: 128, 128>}, {transform_indices = @transform_1, window_bounds = array<i64: 128, 128>}, {pipeline_mode = #tpu.pipeline_mode<synchronous>, transform_indices = @transform_2, window_bounds = array<i64: 1, 128>}, {transform_indices = @transform_3, window_bounds = array<i64: 128, 128>}]} {
    %c0_i32 = arith.constant 0 : i32
    %0 = arith.cmpi eq, %arg1, %c0_i32 : i32
    %1 = arith.extui %0 : i1 to i32
    %c0_i32_0 = arith.constant 0 : i32
    %2 = arith.cmpi ne, %1, %c0_i32_0 : i32
    scf.if %2 {
      %c0_8 = arith.constant 0 : index
      %c0_9 = arith.constant 0 : index
      %9 = vector.load %arg4[%c0_8, %c0_9] : memref<1x128xf32, #tpu.memory_space<vmem>>, vector<1x128xf32>
      %10 = vector.shape_cast %9 : vector<1x128xf32> to vector<1x128xf32>
      %11 = vector.broadcast %10 : vector<1x128xf32> to vector<128x128xf32>
      %c0_10 = arith.constant 0 : index
      %c0_11 = arith.constant 0 : index
      %12 = vector.load %arg5[%c0_10, %c0_11] : memref<128x128xf32, #tpu.memory_space<vmem>>, vector<128x128xf32>
      tpu.vector_store %arg5[%c0_10, %c0_11], %11 {strides = array<i32>} : memref<128x128xf32, #tpu.memory_space<vmem>>, vector<128x128xf32>,
    } else {
    }
    %c0 = arith.constant 0 : index
    %c0_1 = arith.constant 0 : index
    %3 = vector.load %arg5[%c0, %c0_1] : memref<128x128xf32, #tpu.memory_space<vmem>>, vector<128x128xf32>
    %c0_2 = arith.constant 0 : index
    %c0_3 = arith.constant 0 : index
    %4 = vector.load %arg2[%c0_2, %c0_3] : memref<128x128xbf16, #tpu.memory_space<vmem>>, vector<128x128xbf16>
    %c0_4 = arith.constant 0 : index
    %c0_5 = arith.constant 0 : index
    %5 = vector.load %arg3[%c0_4, %c0_5] : memref<128x128xbf16, #tpu.memory_space<vmem>>, vector<128x128xbf16>
    %cst = arith.constant dense<0.000000e+00> : vector<128x128xf32>
    %6 = tpu.matmul %4, %5, %cst {dimension_numbers = #tpu.dot_dimension_numbers<[1], [0], [0], [1], [0, 0, 1, 1], [], []>} : vector<128x128xbf16>, vector<128x128xbf16>, vector<128x128xf32> -> vector<128x128xf32>
    %7 = arith.addf %3, %6 : vector<128x128xf32>
    %c0_6 = arith.constant 0 : index
    %c0_7 = arith.constant 0 : index
    %8 = vector.load %arg5[%c0_6, %c0_7] : memref<128x128xf32, #tpu.memory_space<vmem>>, vector<128x128xf32>
    tpu.vector_store %arg5[%c0_6, %c0_7], %7 {strides = array<i32>} : memref<128x128xf32, #tpu.memory_space<vmem>>, vector<128x128xf32>,
    return
  }
  func.func @transform_0(%arg0: i32, %arg1: i32) -> (i32, i32) {
    %c0_i32 = arith.constant 0 : i32
    return %arg0, %arg1 : i32, i32
  }
  func.func @transform_1(%arg0: i32, %arg1: i32) -> (i32, i32) {
    %c0_i32 = arith.constant 0 : i32
    %c0_i32_0 = arith.constant 0 : i32
    return %arg1, %c0_i32 : i32, i32
  }
  func.func @transform_2(%arg0: i32, %arg1: i32) -> (i32, i32) {
    %c0_i32 = arith.constant 0 : i32
    %c0_i32_0 = arith.constant 0 : i32
    %c0_i32_1 = arith.constant 0 : i32
    return %c0_i32, %c0_i32_0 : i32, i32
  }
  func.func @transform_3(%arg0: i32, %arg1: i32) -> (i32, i32) {
    %c0_i32 = arith.constant 0 : i32
    %c0_i32_0 = arith.constant 0 : i32
    return %arg0, %c0_i32 : i32, i32
  }
}

</mosaic_0001>

<llo_original>
// kernel: tpu_custom_call.1
$region0: #{tpu_custom_call.1}
  #allocation0 [shape = 'u32[]', space=smem, size = 0x4, offset = 0x4, fixed_abs, tag = 'smem constant byte address 0x4 - core index']
  #allocation1 [shape = 'u32[72,128]{1,0:T(1,128)}', space=vmem, size = 0x9000, scoped, tag = 'internal scratch']
  %s0 = inlined_call_operand.hbm [shape: bf16[128,128], index: 0, kind: input, shape index: {}]
  %s1 = inlined_call_operand.hbm [shape: bf16[128,128], index: 1, kind: input, shape index: {}]
  %s2 = inlined_call_operand.vmem [shape: f32[1,128], index: 2, kind: input, shape index: {}]
  %s3 = inlined_call_operand.hbm [shape: f32[128,128], index: 3, kind: output, shape index: {}]
  %s4 = sld [smem:[#allocation0]]
  $region34: #{tpu_custom_call.1} parent=0
    _
  %s6 = ssub.s32 1, %s4
  %s7 = scalar_select 0, %s6, %s4
  $region1: #{tpu_custom_call.1} parent=0
    #allocation2 [shape = 'u8[32768]{0}', space=vmem, size = 0x8000, scoped, tag = 'input window, operand 0, single buffered']
    #allocation3 [shape = 's32[1]{0}', space=sflag, size = 0x4, scoped, tag = 'scoped memory for tpu_custom_call.1']
    #allocation4 [shape = 's32[1]{0}', space=sflag, size = 0x4, scoped, tag = 'scoped memory for tpu_custom_call.1']
    #allocation5 [shape = 'u8[32768]{0}', space=vmem, size = 0x8000, scoped, tag = 'input window, operand 1, single buffered']
    #allocation6 [shape = 's32[1]{0}', space=sflag, size = 0x4, scoped, tag = 'scoped memory for tpu_custom_call.1']
    #allocation7 [shape = 'u8[65536]{0}', space=vmem, size = 0x10000, scoped, tag = 'output window, operand 0, single buffered']
    %8 = vsyncpa [#allocation3], 0
    %9 = vsyncpa [#allocation6], 0
    %10 = vsyncpa [#allocation4], 0
    // Predicated region
    $region2: #{tpu_custom_call.1} parent=1 // pred_check
      _
    $region3: #{tpu_custom_call.1} parent=1 // pred_check_branch
      %12 = sbr.rel (0) target = $region5
    $region4: #{tpu_custom_call.1} parent=1 // pred_region
      %14 = vsyncadd [#allocation3], 0
      %s15 = sshll.u32 %s0, 4
      %s16 = int_to_ptr.hbm [resolvable:$true] %s15
      %s17 = sshll.u32 [#allocation2], 4
      %s18 = int_to_ptr.vmem [resolvable:$true] %s17
      %23 = dma.hbm_to_vmem [thread:$0]  %s16, 1024, %s18, [#allocation3], 64, 64, 4
    $region5: #{tpu_custom_call.1} parent=1 // pred_fallthru
      _
    // Predicated region
    $region6: #{tpu_custom_call.1} parent=1 // pred_check
      _
    $region7: #{tpu_custom_call.1} parent=1 // pred_check_branch
      %25 = sbr.rel (0) target = $region9
    $region8: #{tpu_custom_call.1} parent=1 // pred_region
      %27 = vsyncadd [#allocation6], 0
      %s28 = sshll.u32 %s1, 4
      %s29 = int_to_ptr.hbm [resolvable:$true] %s28
      %s30 = sshll.u32 [#allocation5], 4
      %s31 = int_to_ptr.vmem [resolvable:$true] %s30
      %36 = dma.hbm_to_vmem [thread:$0]  %s29, 1024, %s31, [#allocation6], 64, 64, 4
    $region9: #{tpu_custom_call.1} parent=1 // pred_fallthru
      _
    // Predicated region
    $region10: #{tpu_custom_call.1} parent=1 // pred_check
      _
    $region11: #{tpu_custom_call.1} parent=1 // pred_check_branch
      %38 = sbr.rel (0) target = $region13
    $region12: #{tpu_custom_call.1} parent=1 // pred_region
      _
    $region13: #{tpu_custom_call.1} parent=1 // pred_fallthru
      _
    // Predicated region
    $region14: #{tpu_custom_call.1} parent=1 // pred_check
      _
    $region15: #{tpu_custom_call.1} parent=1 // pred_check_branch
      %40 = sbr.rel (0) target = $region17
    $region16: #{tpu_custom_call.1} parent=1 // pred_region
      %42 = dma.done [#allocation3], 1024
    $region17: #{tpu_custom_call.1} parent=1 // pred_fallthru
      _
    // Predicated region
    $region18: #{tpu_custom_call.1} parent=1 // pred_check
      _
    $region19: #{tpu_custom_call.1} parent=1 // pred_check_branch
      %44 = sbr.rel (0) target = $region21
    $region20: #{tpu_custom_call.1} parent=1 // pred_region
      %46 = dma.done [#allocation6], 1024
    $region21: #{tpu_custom_call.1} parent=1 // pred_fallthru
      _
    %p47 = scmp.eq.s32.totalorder 0, 0
    // Predicated region
    $region22: #{tpu_custom_call.1} parent=1 // pred_check
      %p48 = pneg %p47
    $region23: #{tpu_custom_call.1} parent=1 // pred_check_branch
      %50 = sbr.rel (%p48) target = $region25
    $region24: #{tpu_custom_call.1} parent=1 // pred_region
      %v51 = vld [vmem:[%s2] sm:$0x1]
      %v53 = vperm.slane %v51, 0
      %55 = vst [vmem:[#allocation7] sm:$0xff] %v53
      %56 = vst [vmem:[#allocation7 + $0x8] sm:$0xff] %v53
      %57 = vst [vmem:[#allocation7 + $0x10] sm:$0xff] %v53
      %58 = vst [vmem:[#allocation7 + $0x18] sm:$0xff] %v53
      %59 = vst [vmem:[#allocation7 + $0x20] sm:$0xff] %v53
      %60 = vst [vmem:[#allocation7 + $0x28] sm:$0xff] %v53
      %61 = vst [vmem:[#allocation7 + $0x30] sm:$0xff] %v53
      %62 = vst [vmem:[#allocation7 + $0x38] sm:$0xff] %v53
      %63 = vst [vmem:[#allocation7 + $0x40] sm:$0xff] %v53
      %64 = vst [vmem:[#allocation7 + $0x48] sm:$0xff] %v53
      %65 = vst [vmem:[#allocation7 + $0x50] sm:$0xff] %v53
      %66 = vst [vmem:[#allocation7 + $0x58] sm:$0xff] %v53
      %67 = vst [vmem:[#allocation7 + $0x60] sm:$0xff] %v53
      %68 = vst [vmem:[#allocation7 + $0x68] sm:$0xff] %v53
      %69 = vst [vmem:[#allocation7 + $0x70] sm:$0xff] %v53
      %70 = vst [vmem:[#allocation7 + $0x78] sm:$0xff] %v53
    $region25: #{tpu_custom_call.1} parent=1 // pred_fallthru
      _
    %v71 = vld [vmem:[#allocation7] sm:$0xff]
    %v72 = vld [vmem:[#allocation7 + $0x8] sm:$0xff]
    %v73 = vld [vmem:[#allocation7 + $0x10] sm:$0xff]
    %v74 = vld [vmem:[#allocation7 + $0x18] sm:$0xff]
    %v75 = vld [vmem:[#allocation7 + $0x20] sm:$0xff]
    %v76 = vld [vmem:[#allocation7 + $0x28] sm:$0xff]
    %v77 = vld [vmem:[#allocation7 + $0x30] sm:$0xff]
    %v78 = vld [vmem:[#allocation7 + $0x38] sm:$0xff]
    %v79 = vld [vmem:[#allocation7 + $0x40] sm:$0xff]
    %v80 = vld [vmem:[#allocation7 + $0x48] sm:$0xff]
    %v81 = vld [vmem:[#allocation7 + $0x50] sm:$0xff]
    %v82 = vld [vmem:[#allocation7 + $0x58] sm:$0xff]
    %v83 = vld [vmem:[#allocation7 + $0x60] sm:$0xff]
    %v84 = vld [vmem:[#allocation7 + $0x68] sm:$0xff]
    %v85 = vld [vmem:[#allocation7 + $0x70] sm:$0xff]
    %v86 = vld [vmem:[#allocation7 + $0x78] sm:$0xff]
    %v87 = vld [vmem:[#allocation2] sm:$0xf]
    %v88 = vld [vmem:[#allocation2 + $0x4] sm:$0xf]
    %v89 = vld [vmem:[#allocation2 + $0x8] sm:$0xf]
    %v90 = vld [vmem:[#allocation2 + $0xc] sm:$0xf]
    %v91 = vld [vmem:[#allocation2 + $0x10] sm:$0xf]
    %v92 = vld [vmem:[#allocation2 + $0x14] sm:$0xf]
    %v93 = vld [vmem:[#allocation2 + $0x18] sm:$0xf]
    %v94 = vld [vmem:[#allocation2 + $0x1c] sm:$0xf]
    %v95 = vld [vmem:[#allocation2 + $0x20] sm:$0xf]
    %v96 = vld [vmem:[#allocation2 + $0x24] sm:$0xf]
    %v97 = vld [vmem:[#allocation2 + $0x28] sm:$0xf]
    %v98 = vld [vmem:[#allocation2 + $0x2c] sm:$0xf]
    %v99 = vld [vmem:[#allocation2 + $0x30] sm:$0xf]
    %v100 = vld [vmem:[#allocation2 + $0x34] sm:$0xf]
    %v101 = vld [vmem:[#allocation2 + $0x38] sm:$0xf]
    %v102 = vld [vmem:[#allocation2 + $0x3c] sm:$0xf]
    %v103 = vld [vmem:[#allocation5] sm:$0xf]
    %v104 = vld [vmem:[#allocation5 + $0x4] sm:$0xf]
    %v105 = vld [vmem:[#allocation5 + $0x8] sm:$0xf]
    %v106 = vld [vmem:[#allocation5 + $0xc] sm:$0xf]
    %v107 = vld [vmem:[#allocation5 + $0x10] sm:$0xf]
    %v108 = vld [vmem:[#allocation5 + $0x14] sm:$0xf]
    %v109 = vld [vmem:[#allocation5 + $0x18] sm:$0xf]
    %v110 = vld [vmem:[#allocation5 + $0x1c] sm:$0xf]
    %v111 = vld [vmem:[#allocation5 + $0x20] sm:$0xf]
    %v112 = vld [vmem:[#allocation5 + $0x24] sm:$0xf]
    %v113 = vld [vmem:[#allocation5 + $0x28] sm:$0xf]
    %v114 = vld [vmem:[#allocation5 + $0x2c] sm:$0xf]
    %v115 = vld [vmem:[#allocation5 + $0x30] sm:$0xf]
    %v116 = vld [vmem:[#allocation5 + $0x34] sm:$0xf]
    %v117 = vld [vmem:[#allocation5 + $0x38] sm:$0xf]
    %v118 = vld [vmem:[#allocation5 + $0x3c] sm:$0xf]
    %v135 = vunpack.c.l.b16 %v87
    %v136 = vunpack.c.l.b16 %v88
    %v137 = vunpack.c.l.b16 %v89
    %v138 = vunpack.c.l.b16 %v90
    %v139 = vunpack.c.l.b16 %v91
    %v140 = vunpack.c.l.b16 %v92
    %v141 = vunpack.c.l.b16 %v93
    %v142 = vunpack.c.l.b16 %v94
    %v143 = vunpack.c.l.b16 %v95
    %v144 = vunpack.c.l.b16 %v96
    %v145 = vunpack.c.l.b16 %v97
    %v146 = vunpack.c.l.b16 %v98
    %v147 = vunpack.c.l.b16 %v99
    %v148 = vunpack.c.l.b16 %v100
    %v149 = vunpack.c.l.b16 %v101
    %v150 = vunpack.c.l.b16 %v102
    %v151 = vpack.c.b16 %v136, %v135
    %v152 = vpack.c.b16 %v138, %v137
    %v153 = vpack.c.b16 %v140, %v139
    %v154 = vpack.c.b16 %v142, %v141
    %v155 = vpack.c.b16 %v144, %v143
    %v156 = vpack.c.b16 %v146, %v145
    %v157 = vpack.c.b16 %v148, %v147
    %v158 = vpack.c.b16 %v150, %v149
    %v183 = vunpack.c.l.b16 %v103
    %v184 = vunpack.c.l.b16 %v104
    %v185 = vunpack.c.l.b16 %v105
    %v186 = vunpack.c.l.b16 %v106
    %v187 = vunpack.c.l.b16 %v107
    %v188 = vunpack.c.l.b16 %v108
    %v189 = vunpack.c.l.b16 %v109
    %v190 = vunpack.c.l.b16 %v110
    %v191 = vunpack.c.l.b16 %v111
    %v192 = vunpack.c.l.b16 %v112
    %v193 = vunpack.c.l.b16 %v113
    %v194 = vunpack.c.l.b16 %v114
    %v195 = vunpack.c.l.b16 %v115
    %v196 = vunpack.c.l.b16 %v116
    %v197 = vunpack.c.l.b16 %v117
    %v198 = vunpack.c.l.b16 %v118
    %v199 = vpack.c.b16 %v184, %v183
    %v200 = vpack.c.b16 %v186, %v185
    %v201 = vpack.c.b16 %v188, %v187
    %v202 = vpack.c.b16 %v190, %v189
    %v203 = vpack.c.b16 %v192, %v191
    %v204 = vpack.c.b16 %v194, %v193
    %v205 = vpack.c.b16 %v196, %v195
    %v206 = vpack.c.b16 %v198, %v197
    %215 = vmatpush.bf16.msra.mxu0 %v206
    %216 = vmatpush.bf16.msra.mxu0 %v205
    %217 = vmatpush.bf16.msra.mxu0 %v204
    %218 = vmatpush.bf16.msra.mxu0 %v203
    %219 = vmatpush.bf16.msra.mxu0 %v202
    %220 = vmatpush.bf16.msra.mxu0 %v201
    %221 = vmatpush.bf16.msra.mxu0 %v200
    %222 = vmatpush.bf16.msra.mxu0 %v199
    %223 = vmatmul.bf16.gmra.mxu0 %v151
    %v224 = vpop.f32.mrf.mxu0
    %v225 = vadd.f32 0.0, %v224
    %v226 = vpop.f32.mrf.mxu0
    %v227 = vadd.f32 0.0, %v226
    %228 = vmatmul.bf16.gmra.mxu0 %v152
    %v229 = vpop.f32.mrf.mxu0
    %v230 = vadd.f32 0.0, %v229
    %v231 = vpop.f32.mrf.mxu0
    %v232 = vadd.f32 0.0, %v231
    %233 = vmatmul.bf16.gmra.mxu0 %v153
    %v234 = vpop.f32.mrf.mxu0
    %v235 = vadd.f32 0.0, %v234
    %v236 = vpop.f32.mrf.mxu0
    %v237 = vadd.f32 0.0, %v236
    %238 = vmatmul.bf16.gmra.mxu0 %v154
    %v239 = vpop.f32.mrf.mxu0
    %v240 = vadd.f32 0.0, %v239
    %v241 = vpop.f32.mrf.mxu0
    %v242 = vadd.f32 0.0, %v241
    %243 = vmatmul.bf16.gmra.mxu0 %v155
    %v244 = vpop.f32.mrf.mxu0
    %v245 = vadd.f32 0.0, %v244
    %v246 = vpop.f32.mrf.mxu0
    %v247 = vadd.f32 0.0, %v246
    %248 = vmatmul.bf16.gmra.mxu0 %v156
    %v249 = vpop.f32.mrf.mxu0
    %v250 = vadd.f32 0.0, %v249
    %v251 = vpop.f32.mrf.mxu0
    %v252 = vadd.f32 0.0, %v251
    %253 = vmatmul.bf16.gmra.mxu0 %v157
    %v254 = vpop.f32.mrf.mxu0
    %v255 = vadd.f32 0.0, %v254
    %v256 = vpop.f32.mrf.mxu0
    %v257 = vadd.f32 0.0, %v256
    %258 = vmatmul.bf16.gmra.mxu0 %v158
    %v259 = vpop.f32.mrf.mxu0
    %v260 = vadd.f32 0.0, %v259
    %v261 = vpop.f32.mrf.mxu0
    %v262 = vadd.f32 0.0, %v261
    %263 = vdwg.mxu0
    %v264 = vadd.f32 %v71, %v225
    %v265 = vadd.f32 %v72, %v227
    %v266 = vadd.f32 %v73, %v230
    %v267 = vadd.f32 %v74, %v232
    %v268 = vadd.f32 %v75, %v235
    %v269 = vadd.f32 %v76, %v237
    %v270 = vadd.f32 %v77, %v240
    %v271 = vadd.f32 %v78, %v242
    %v272 = vadd.f32 %v79, %v245
    %v273 = vadd.f32 %v80, %v247
    %v274 = vadd.f32 %v81, %v250
    %v275 = vadd.f32 %v82, %v252
    %v276 = vadd.f32 %v83, %v255
    %v277 = vadd.f32 %v84, %v257
    %v278 = vadd.f32 %v85, %v260
    %v279 = vadd.f32 %v86, %v262
    %280 = vst [vmem:[#allocation7] sm:$0xff] %v264
    %281 = vst [vmem:[#allocation7 + $0x8] sm:$0xff] %v265
    %282 = vst [vmem:[#allocation7 + $0x10] sm:$0xff] %v266
    %283 = vst [vmem:[#allocation7 + $0x18] sm:$0xff] %v267
    %284 = vst [vmem:[#allocation7 + $0x20] sm:$0xff] %v268
    %285 = vst [vmem:[#allocation7 + $0x28] sm:$0xff] %v269
    %286 = vst [vmem:[#allocation7 + $0x30] sm:$0xff] %v270
    %287 = vst [vmem:[#allocation7 + $0x38] sm:$0xff] %v271
    %288 = vst [vmem:[#allocation7 + $0x40] sm:$0xff] %v272
    %289 = vst [vmem:[#allocation7 + $0x48] sm:$0xff] %v273
    %290 = vst [vmem:[#allocation7 + $0x50] sm:$0xff] %v274
    %291 = vst [vmem:[#allocation7 + $0x58] sm:$0xff] %v275
    %292 = vst [vmem:[#allocation7 + $0x60] sm:$0xff] %v276
    %293 = vst [vmem:[#allocation7 + $0x68] sm:$0xff] %v277
    %294 = vst [vmem:[#allocation7 + $0x70] sm:$0xff] %v278
    %295 = vst [vmem:[#allocation7 + $0x78] sm:$0xff] %v279
    // Predicated region
    $region26: #{tpu_custom_call.1} parent=1 // pred_check
      _
    $region27: #{tpu_custom_call.1} parent=1 // pred_check_branch
      %297 = sbr.rel (0) target = $region29
    $region28: #{tpu_custom_call.1} parent=1 // pred_region
      %299 = vsyncadd [#allocation4], 0
      %s300 = sshll.u32 [#allocation7], 4
      %s301 = int_to_ptr.vmem [resolvable:$true] %s300
      %s302 = sshll.u32 %s3, 4
      %s303 = int_to_ptr.hbm [resolvable:$true] %s302
      %308 = dma.vmem_to_hbm [thread:$0]  %s301, 2048, %s303, [#allocation4], 128, 128, 8
    $region29: #{tpu_custom_call.1} parent=1 // pred_fallthru
      _
    // Predicated region
    $region30: #{tpu_custom_call.1} parent=1 // pred_check
      _
    $region31: #{tpu_custom_call.1} parent=1 // pred_check_branch
      %310 = sbr.rel (0) target = $region33
    $region32: #{tpu_custom_call.1} parent=1 // pred_region
      %312 = dma.done [#allocation4], 2048
    $region33: #{tpu_custom_call.1} parent=1 // pred_fallthru
      _
    %313 = vsyncpa [#allocation3], 1
    %314 = vsyncpa [#allocation6], 1
    %315 = vsyncpa [#allocation4], 1

</llo_original>
